<compile_context>
chip_gen: v7x
topology: tpu7x:2x2x1
jax: 0.10.0
libtpu: 0.0.40
codegen_flags: <defaults>
</compile_context>

<pallas_src>
import functools
import math

import jax
import jax.numpy as jnp
from jax.experimental import pallas as pl
from jax.experimental.pallas import tpu as pltpu


# ----------------------------------------------------------------------------
# Tiling helpers / compiler params
# ----------------------------------------------------------------------------

_ROW_TILE = 1024                      # row tile cap for matmul / proj kernels
_VMEM_LIMIT = 48 * 1024 * 1024        # safe under v7x's 64 MiB physical VMEM


def _cparams(*sems):
    return pltpu.CompilerParams(dimension_semantics=tuple(sems),
                                vmem_limit_bytes=_VMEM_LIMIT)


def _dw_tile_rows(Ho, Wo, C, P, off, budget=8 * 1024 * 1024):
    """Largest divisor of Ho whose (strip + output) working set fits the budget."""
    best = 1
    for t in range(1, Ho + 1):
        if Ho % t:
            continue
        strip_bytes = 2 * P * (t + off) * (Wo + off) * C * 2   # both slots, bf16
        out_bytes = 2 * t * Wo * C * 2                         # double-buffered out
        if strip_bytes + out_bytes <= budget:
            best = t
    return best


def _act(y, act):
    if act == "silu":
        return y * jax.nn.sigmoid(y)
    return y


# ----------------------------------------------------------------------------
# Matmul (+bias +activation) kernel: stem conv (im2col) and all 1x1 expand/head
# ----------------------------------------------------------------------------

def _matmul_bias_act_kernel(x_ref, w_ref, b_ref, o_ref, *, act):
    # x: (tile, K) bf16, w: (K, N) bf16 (BN scale pre-folded), b: (1, N) f32
    y = jnp.dot(x_ref[...].astype(jnp.bfloat16), w_ref[...],
                preferred_element_type=jnp.float32)
    o_ref[...] = _act(y + b_ref[...], act).astype(o_ref.dtype)


def matmul_bias_act(x, w_bf16, bias_1n, act="silu"):
    M, K = x.shape
    N = w_bf16.shape[1]
    tile = min(M, _ROW_TILE)
    return pl.pallas_call(
        functools.partial(_matmul_bias_act_kernel, act=act),
        out_shape=jax.ShapeDtypeStruct((M, N), jnp.bfloat16),
        grid=(pl.cdiv(M, tile),),
        in_specs=[
            pl.BlockSpec((tile, K), lambda i: (i, 0)),
            pl.BlockSpec((K, N), lambda i: (0, 0)),
            pl.BlockSpec((1, N), lambda i: (0, 0)),
        ],
        out_specs=pl.BlockSpec((tile, N), lambda i: (i, 0)),
        compiler_params=_cparams("parallel"),
    )(x, w_bf16, bias_1n)


def conv1x1(x, w_bf16, bias, act="silu"):
    N, H, W, C = x.shape
    y = matmul_bias_act(x.reshape(N * H * W, C), w_bf16, bias, act)
    return y.reshape(N, H, W, -1)


def _im2col_mat(x_nhwc, k, stride, pad):
    # Regular conv (stem only, Cin=3): (N*Ho*Wo, k*k*C) matrix for an MXU matmul.
    N, H, W, C = x_nhwc.shape
    xp = jnp.pad(x_nhwc, ((0, 0), (pad, pad), (pad, pad), (0, 0)))
    Ho = (H + 2 * pad - k) // stride + 1
    Wo = (W + 2 * pad - k) // stride + 1
    cols = []
    for i in range(k):
        for j in range(k):
            cols.append(xp[:, i:i + stride * (Ho - 1) + 1:stride,
                              j:j + stride * (Wo - 1) + 1:stride, :])
    patches = jnp.stack(cols, axis=3)            # (N, Ho, Wo, k*k, C)
    return patches.reshape(N * Ho * Wo, k * k * C), Ho, Wo


def conv_stem(x_f32, w_bf16, bias, k, stride, pad, act="silu"):
    N = x_f32.shape[0]
    pm, Ho, Wo = _im2col_mat(x_f32, k, stride, pad)
    y = matmul_bias_act(pm.astype(jnp.bfloat16), w_bf16, bias, act)
    return y.reshape(N, Ho, Wo, -1)


# ----------------------------------------------------------------------------
# Depthwise conv (+BN bias +SiLU) fused with the SE global-average squeeze.
# Input comes in as padded, parity-decomposed slabs in HBM (memory_space=ANY);
# the kernel double-buffers row strips into VMEM via manual DMA.
# ----------------------------------------------------------------------------

def _dw_se_kernel(slabs_ref, w_ref, b_ref, o_ref, sum_ref, strip_ref, sem_ref, *,
                  k, stride, P, tile_ho, halo, Wo, Tn, total, inv_hw):
    bi = pl.program_id(0)
    ti = pl.program_id(1)
    lin = bi * Tn + ti
    slot = lin % 2

    def start_fetch(bb, tt, sl):
        for p in range(P):
            pltpu.make_async_copy(
                slabs_ref.at[bb, p, pl.ds(tt * tile_ho, halo)],
                strip_ref.at[sl * P + p],
                sem_ref.at[sl * P + p],
            ).start()

    @pl.when(lin == 0)
    def _prime():
        start_fetch(bi, ti, slot)

    # Wait for the strips of the current tile.
    for p in range(P):
        pltpu.make_async_copy(
            slabs_ref.at[bi, p, pl.ds(ti * tile_ho, halo)],
            strip_ref.at[slot * P + p],
            sem_ref.at[slot * P + p],
        ).wait()

    # Prefetch the next tile (possibly of the next batch element).
    @pl.when(lin + 1 < total)
    def _prefetch():
        nxt = lin + 1
        start_fetch(nxt // Tn, nxt % Tn, 1 - slot)

    # k*k shifted multiply-adds from VMEM slices (all unit-stride: stride-2
    # layers were parity-decomposed on the host side).
    acc = None
    for i in range(k):
        for j in range(k):
            pi = (i % stride) * stride + (j % stride)
            tap = strip_ref[slot * P + pi,
                            pl.ds(i // stride, tile_ho),
                            pl.ds(j // stride, Wo), :].astype(jnp.float32)
            term = tap * w_ref[i * k + j]                       # w tap: (1, C)
            acc = term if acc is None else acc + term
    y = acc + b_ref[...]
    y = y * jax.nn.sigmoid(y)                                   # SiLU
    o_ref[0] = y.astype(jnp.bfloat16)

    # Fused SE squeeze: accumulate channel sums across the row-tile axis.
    @pl.when(ti == 0)
    def _init_sum():
        sum_ref[...] = jnp.zeros_like(sum_ref)

    sum_ref[...] += jnp.sum(y, axis=(0, 1))[None, None, :]

    @pl.when(ti == Tn - 1)
    def _finalize_sum():
        sum_ref[...] = sum_ref[...] * inv_hw


def _dw_prepare(x_nhwc, k, s):
    """Pad + parity-decompose so every depthwise tap read is unit-stride."""
    x = x_nhwc.astype(jnp.bfloat16)
    N, H, W, C = x.shape
    p = (k - 1) // 2
    Ho = (H + 2 * p - k) // s + 1
    Wo = (W + 2 * p - k) // s + 1
    off = (k - 1) // s
    Hq, Wq = Ho + off, Wo + off
    xp = jnp.pad(x, ((0, 0), (p, p), (p, p), (0, 0)))
    Hp, Wp = H + 2 * p, W + 2 * p
    xp = jnp.pad(xp, ((0, 0),
                      (0, max(0, s * Hq - Hp)),
                      (0, max(0, s * Wq - Wp)),
                      (0, 0)))
    slabs = []
    for qr in range(s):
        for qc in range(s):
            slabs.append(xp[:, qr::s, qc::s, :][:, :Hq, :Wq, :])
    slabs = jnp.stack(slabs, axis=1)             # (N, s*s, Hq, Wq, C)
    return slabs, Ho, Wo, Hq, Wq


def dwconv_se_pool(x_nhwc, w_kk1c, bias_1c, k, stride):
    N, H, W, C = x_nhwc.shape
    slabs, Ho, Wo, Hq, Wq = _dw_prepare(x_nhwc, k, stride)
    P = stride * stride
    off = (k - 1) // stride
    tile_ho = _dw_tile_rows(Ho, Wo, C, P, off)
    halo = tile_ho + off
    Tn = Ho // tile_ho
    kk = k * k

    kernel = functools.partial(
        _dw_se_kernel, k=k, stride=stride, P=P, tile_ho=tile_ho, halo=halo,
        Wo=Wo, Tn=Tn, total=N * Tn, inv_hw=1.0 / float(Ho * Wo))

    out, pooled = pl.pallas_call(
        kernel,
        out_shape=(jax.ShapeDtypeStruct((N, Ho, Wo, C), jnp.bfloat16),
                   jax.ShapeDtypeStruct((N, 1, C), jnp.float32)),
        grid=(N, Tn),
        in_specs=[
            pl.BlockSpec(memory_space=pl.ANY),                  # slabs in HBM
            pl.BlockSpec((kk, 1, C), lambda b, t: (0, 0, 0)),
            pl.BlockSpec((1, C), lambda b, t: (0, 0)),
        ],
        out_specs=(
            pl.BlockSpec((1, tile_ho, Wo, C), lambda b, t: (b, t, 0, 0)),
            pl.BlockSpec((1, 1, C), lambda b, t: (b, 0, 0)),    # accumulator
        ),
        scratch_shapes=[
            pltpu.VMEM((2 * P, halo, Wq, C), jnp.bfloat16),
            pltpu.SemaphoreType.DMA((2 * P,)),
        ],
        compiler_params=_cparams("arbitrary", "arbitrary"),
    )(slabs, w_kk1c, bias_1c)
    return out, pooled.reshape(N, C)


# ----------------------------------------------------------------------------
# SE excitation MLP (tiny): fc1 + SiLU -> fc2 + sigmoid on the pooled (N, C)
# ----------------------------------------------------------------------------

def _se_fc_kernel(p_ref, w1_ref, b1_ref, w2_ref, b2_ref, o_ref):
    s = jnp.dot(p_ref[...], w1_ref[...], preferred_element_type=jnp.float32)
    s = s + b1_ref[...]
    s = s * jax.nn.sigmoid(s)                                   # SiLU
    g = jnp.dot(s, w2_ref[...], preferred_element_type=jnp.float32)
    o_ref[...] = jax.nn.sigmoid(g + b2_ref[...])


def se_fc(pooled_nc, se):
    Nb, C = pooled_nc.shape
    return pl.pallas_call(
        _se_fc_kernel,
        out_shape=jax.ShapeDtypeStruct((Nb, C), jnp.float32),
    )(pooled_nc, se["w1"], se["b1"], se["w2"], se["b2"])


# ----------------------------------------------------------------------------
# Fused SE gating + 1x1 projection conv (+BN bias) + optional residual add
# ----------------------------------------------------------------------------

def _proj_kernel(x_ref, g_ref, w_ref, b_ref, o_ref):
    xg = x_ref[0].astype(jnp.float32) * g_ref[0]                # (tile, Cexp)
    y = jnp.dot(xg.astype(jnp.bfloat16), w_ref[...],
                preferred_element_type=jnp.float32)
    o_ref[0] = (y + b_ref[...]).astype(jnp.bfloat16)


def _proj_res_kernel(x_ref, g_ref, w_ref, b_ref, r_ref, o_ref):
    xg = x_ref[0].astype(jnp.float32) * g_ref[0]
    y = jnp.dot(xg.astype(jnp.bfloat16), w_ref[...],
                preferred_element_type=jnp.float32)
    o_ref[0] = (y + b_ref[...] + r_ref[0].astype(jnp.float32)).astype(jnp.bfloat16)


def proj_block(dw_nhwc, gate_nc, w_bf16, bias_1c, res_nhwc=None):
    N, Ho, Wo, Cexp = dw_nhwc.shape
    Cout = w_bf16.shape[1]
    HW = Ho * Wo
    tile = min(HW, _ROW_TILE)
    grid = (N, pl.cdiv(HW, tile))
    x3 = dw_nhwc.reshape(N, HW, Cexp)
    g3 = gate_nc.reshape(N, 1, Cexp)
    in_specs = [
        pl.BlockSpec((1, tile, Cexp), lambda b, t: (b, t, 0)),
        pl.BlockSpec((1, 1, Cexp), lambda b, t: (b, 0, 0)),
        pl.BlockSpec((Cexp, Cout), lambda b, t: (0, 0)),
        pl.BlockSpec((1, Cout), lambda b, t: (0, 0)),
    ]
    out_spec = pl.BlockSpec((1, tile, Cout), lambda b, t: (b, t, 0))
    if res_nhwc is None:
        out = pl.pallas_call(
            _proj_kernel,
            out_shape=jax.ShapeDtypeStruct((N, HW, Cout), jnp.bfloat16),
            grid=grid, in_specs=in_specs, out_specs=out_spec,
            compiler_params=_cparams("parallel", "parallel"),
        )(x3, g3, w_bf16, bias_1c)
    else:
        r3 = res_nhwc.reshape(N, HW, Cout)
        out = pl.pallas_call(
            _proj_res_kernel,
            out_shape=jax.ShapeDtypeStruct((N, HW, Cout), jnp.bfloat16),
            grid=grid,
            in_specs=in_specs + [pl.BlockSpec((1, tile, Cout),
                                              lambda b, t: (b, t, 0))],
            out_specs=out_spec,
            compiler_params=_cparams("parallel", "parallel"),
        )(x3, g3, w_bf16, bias_1c, r3)
    return out.reshape(N, Ho, Wo, Cout)


# ----------------------------------------------------------------------------
# Global average pool (AdaptiveAvgPool2d(1) + flatten)
# ----------------------------------------------------------------------------

def _gap_kernel(x_ref, o_ref):
    o_ref[0] = jnp.mean(x_ref[0].astype(jnp.float32), axis=0, keepdims=True)


def global_avgpool(x_nhwc):
    N, H, W, C = x_nhwc.shape
    HW = H * W
    out = pl.pallas_call(
        _gap_kernel,
        out_shape=jax.ShapeDtypeStruct((N, 1, C), jnp.float32),
        grid=(N,),
        in_specs=[pl.BlockSpec((1, HW, C), lambda b: (b, 0, 0))],
        out_specs=pl.BlockSpec((1, 1, C), lambda b: (b, 0, 0)),
        compiler_params=_cparams("parallel"),
    )(x_nhwc.reshape(N, HW, C))
    return out.reshape(N, C)


# ----------------------------------------------------------------------------
# Model assembly
# ----------------------------------------------------------------------------

def mbconv_block(x, blk):
    h = x
    if "expand" in blk:
        h = conv1x1(h, blk["expand"]["w"], blk["expand"]["bias"], "silu")
    dw_out, pooled = dwconv_se_pool(h, blk["dw"]["w"], blk["dw"]["bias"],
                                    blk["kernel"], blk["stride"])
    gate = se_fc(pooled, blk["se"])                              # (N, Cexp) f32
    use_res = blk["stride"] == 1 and blk["in"] == blk["out"]
    res = x if use_res else None                 # stochastic_depth_prob == 0
    return proj_block(dw_out, gate, blk["proj"]["w"], blk["proj"]["bias"], res)


def efficientnet_encoder(x_nchw, params):
    # layout: accept NCHW (PyTorch), compute in NHWC.
    x = jnp.transpose(x_nchw, (0, 2, 3, 1)).astype(jnp.float32)
    st = params["stem"]
    x = conv_stem(x, st["w"], st["bias"], k=3, stride=2, pad=1, act="silu")
    for blk in params["blocks"]:
        x = mbconv_block(x, blk)
    hd = params["head"]
    x = conv1x1(x, hd["w"], hd["bias"], "silu")
    return global_avgpool(x)      # AdaptiveAvgPool2d(1)+flatten, classifier=Identity


# ----------------------------------------------------------------------------
# Deterministic synthetic parameters with torchvision EfficientNet shapes
# (BatchNorm running stats folded into the conv weights / bias at build time)
# ----------------------------------------------------------------------------

def _make_divisible(v, divisor=8, min_value=None):
    if min_value is None:
        min_value = divisor
    new_v = max(min_value, int(v + divisor / 2) // divisor * divisor)
    if new_v < 0.9 * v:
        new_v += divisor
    return new_v


WIDTH_DEPTH = {0: (1.0, 1.0), 1: (1.0, 1.1), 2: (1.1, 1.2), 3: (1.2, 1.4),
               4: (1.4, 1.8), 5: (1.6, 2.2), 6: (1.8, 2.6), 7: (2.0, 3.1)}

# (expand_ratio, kernel, stride, in_ch, out_ch, num_layers) -- efficientnet v1 base
BASE_SETTINGS = [
    (1, 3, 1, 32, 16, 1),
    (6, 3, 2, 16, 24, 2),
    (6, 5, 2, 24, 40, 2),
    (6, 3, 2, 40, 80, 3),
    (6, 5, 1, 80, 112, 3),
    (6, 5, 2, 112, 192, 4),
    (6, 3, 1, 192, 320, 1),
]


class ParamGen:
    def __init__(self, seed):
        self.key = jax.random.PRNGKey(seed)
        self.i = 0

    def _k(self):
        self.i += 1
        return jax.random.fold_in(self.key, self.i)

    def conv(self, kh, kw, cin, cout):
        std = 1.0 / math.sqrt(kh * kw * cin)
        return std * jax.random.normal(self._k(), (kh, kw, cin, cout), jnp.float32)

    def dw(self, k, c):
        std = 1.0 / math.sqrt(k * k)
        return std * jax.random.normal(self._k(), (k * k, c), jnp.float32)

    def fc(self, cin, cout):
        std = 1.0 / math.sqrt(cin)
        return std * jax.random.normal(self._k(), (cin, cout), jnp.float32)

    def bias(self, c):
        return 0.01 * jax.random.normal(self._k(), (c,), jnp.float32)

    def bn_scale(self, c):  # gamma / sqrt(running_var + eps)
        return 1.0 + 0.05 * jax.random.normal(self._k(), (c,), jnp.float32)

    def bn_bias(self, c):   # beta - running_mean * scale
        return 0.05 * jax.random.normal(self._k(), (c,), jnp.float32)


def build_params(variant, seed=42):
    assert 0 <= variant <= 7
    wm, dm = WIDTH_DEPTH[variant]
    adjust = lambda c: _make_divisible(c * wm, 8)
    pg = ParamGen(seed)

    def conv_folded(kh, kw, cin, cout):
        # Fold BN scale into the (kh*kw*cin, cout) matmul weight; store bf16.
        w = pg.conv(kh, kw, cin, cout)
        scale = pg.bn_scale(cout)
        bias = pg.bn_bias(cout)
        wf = (w * scale).reshape(kh * kw * cin, cout).astype(jnp.bfloat16)
        return {"w": wf, "bias": bias.reshape(1, cout)}

    def dw_folded(k, c):
        w = pg.dw(k, c)
        scale = pg.bn_scale(c)
        bias = pg.bn_bias(c)
        return {"w": (w * scale).reshape(k * k, 1, c),       # f32, (KK, 1, C)
                "bias": bias.reshape(1, c)}

    stem_out = adjust(32)
    params = {"stem": conv_folded(3, 3, 3, stem_out), "blocks": []}

    prev_out = stem_out
    for (er, k, s, ic, oc, nl) in BASE_SETTINGS:
        ic_a, oc_a = adjust(ic), adjust(oc)
        nl_a = int(math.ceil(nl * dm))
        for li in range(nl_a):
            stride = s if li == 0 else 1
            bin_ch = ic_a if li == 0 else oc_a
            exp = bin_ch * er
            sq = max(1, bin_ch // 4)
            blk = {"stride": stride, "kernel": k, "in": bin_ch, "out": oc_a}
            if er != 1:
                blk["expand"] = conv_folded(1, 1, bin_ch, exp)
            blk["dw"] = dw_folded(k, exp)
            blk["se"] = {"w1": pg.fc(exp, sq), "b1": pg.bias(sq).reshape(1, sq),
                         "w2": pg.fc(sq, exp), "b2": pg.bias(exp).reshape(1, exp)}
            blk["proj"] = conv_folded(1, 1, exp, oc_a)
            params["blocks"].append(blk)
        prev_out = oc_a

    head_out = 4 * prev_out   # 1280 for B0
    params["head"] = conv_folded(1, 1, prev_out, head_out)
    params["feature_dim"] = head_out
    return params


# ----------------------------------------------------------------------------
# Main
# ----------------------------------------------------------------------------

if __name__ == "__main__":
    variant = 0  # EfficientNet-B0
    params = build_params(variant, seed=42)

    # Small NCHW input (3 channels as required by EfficientNet); 32x32 spatial
    # reaches 1x1 at the head exactly like 224x224 reaches 7x7.
    key = jax.random.PRNGKey(0)
    x = jax.random.normal(key, (2, 3, 32, 32), dtype=jnp.float32)

    feats = efficientnet_encoder(x, params)
    feats = jax.block_until_ready(feats)

    assert feats.shape == (2, params["feature_dim"]), feats.shape
    assert bool(jnp.all(jnp.isfinite(feats)))
    print("KERNEL_OK")
</pallas_src>

<mosaic_0001>
module attributes {stable_mosaic.version = 11 : i64} {
  func.func @_matmul_bias_act_kernel(%arg0: i32, %arg1: memref<512x27xbf16, #tpu.memory_space<vmem>>, %arg2: memref<27x32xbf16, #tpu.memory_space<vmem>>, %arg3: memref<1x32xf32, #tpu.memory_space<vmem>>, %arg4: memref<512x32xbf16, #tpu.memory_space<vmem>>) attributes {dimension_semantics = [#tpu.dimension_semantics<parallel>], iteration_bounds = array<i64: 1>, scalar_prefetch = 0 : i64, scratch_operands = 0 : i64, tpu.core_type = #tpu.core_type<tc>, window_params = [{transform_indices = @transform_0, window_bounds = array<i64: 512, 27>}, {pipeline_mode = #tpu.pipeline_mode<synchronous>, transform_indices = @transform_1, window_bounds = array<i64: 27, 32>}, {pipeline_mode = #tpu.pipeline_mode<synchronous>, transform_indices = @transform_2, window_bounds = array<i64: 1, 32>}, {transform_indices = @transform_3, window_bounds = array<i64: 512, 32>}]} {
    %c0 = arith.constant 0 : index
    %c0_0 = arith.constant 0 : index
    %0 = vector.load %arg1[%c0, %c0_0] : memref<512x27xbf16, #tpu.memory_space<vmem>>, vector<512x27xbf16>
    %c0_1 = arith.constant 0 : index
    %c0_2 = arith.constant 0 : index
    %1 = vector.load %arg2[%c0_1, %c0_2] : memref<27x32xbf16, #tpu.memory_space<vmem>>, vector<27x32xbf16>
    %cst = arith.constant dense<0.000000e+00> : vector<512x32xf32>
    %2 = tpu.matmul %0, %1, %cst {dimension_numbers = #tpu.dot_dimension_numbers<[1], [0], [0], [1], [0, 0, 1, 1], [], []>} : vector<512x27xbf16>, vector<27x32xbf16>, vector<512x32xf32> -> vector<512x32xf32>
    %c0_3 = arith.constant 0 : index
    %c0_4 = arith.constant 0 : index
    %3 = vector.load %arg3[%c0_3, %c0_4] : memref<1x32xf32, #tpu.memory_space<vmem>>, vector<1x32xf32>
    %4 = vector.broadcast %3 : vector<1x32xf32> to vector<512x32xf32>
    %5 = arith.addf %2, %4 : vector<512x32xf32>
    %6 = arith.negf %5 : vector<512x32xf32>
    %7 = math.exp %6 : vector<512x32xf32>
    %cst_5 = arith.constant 1.000000e+00 : f32
    %8 = vector.broadcast %cst_5 : f32 to vector<512x32xf32>
    %9 = arith.addf %8, %7 : vector<512x32xf32>
    %10 = arith.divf %8, %9 : vector<512x32xf32>
    %11 = arith.mulf %5, %10 : vector<512x32xf32>
    %12 = arith.truncf %11 : vector<512x32xf32> to vector<512x32xbf16>
    %c0_6 = arith.constant 0 : index
    %c0_7 = arith.constant 0 : index
    %13 = vector.load %arg4[%c0_6, %c0_7] : memref<512x32xbf16, #tpu.memory_space<vmem>>, vector<512x32xbf16>
    tpu.vector_store %arg4[%c0_6, %c0_7], %12 {strides = array<i32>} : memref<512x32xbf16, #tpu.memory_space<vmem>>, vector<512x32xbf16>,
    return
  }
  func.func @transform_0(%arg0: i32) -> (i32, i32) {
    %c0_i32 = arith.constant 0 : i32
    %c0_i32_0 = arith.constant 0 : i32
    return %arg0, %c0_i32 : i32, i32
  }
  func.func @transform_1(%arg0: i32) -> (i32, i32) {
    %c0_i32 = arith.constant 0 : i32
    %c0_i32_0 = arith.constant 0 : i32
    %c0_i32_1 = arith.constant 0 : i32
    return %c0_i32, %c0_i32_0 : i32, i32
  }
  func.func @transform_2(%arg0: i32) -> (i32, i32) {
    %c0_i32 = arith.constant 0 : i32
    %c0_i32_0 = arith.constant 0 : i32
    %c0_i32_1 = arith.constant 0 : i32
    return %c0_i32, %c0_i32_0 : i32, i32
  }
  func.func @transform_3(%arg0: i32) -> (i32, i32) {
    %c0_i32 = arith.constant 0 : i32
    %c0_i32_0 = arith.constant 0 : i32
    return %arg0, %c0_i32 : i32, i32
  }
}

</mosaic_0001>

<llo_original>
// kernel: tpu_custom_call.1
$region0: #{tpu_custom_call.1}
  #allocation0 [shape = 'u32[]', space=smem, size = 0x4, offset = 0x4, fixed_abs, tag = 'smem constant byte address 0x4 - core index']
  #allocation1 [shape = 'u32[144,128]{1,0:T(1,128)}', space=vmem, size = 0x12000, scoped, tag = 'internal scratch']
  %s0 = inlined_call_operand.vmem [shape: bf16[512,27], index: 0, kind: input, shape index: {}]
  %s1 = inlined_call_operand.vmem [shape: bf16[27,32], index: 1, kind: input, shape index: {}]
  %s2 = inlined_call_operand.vmem [shape: f32[1,32], index: 2, kind: input, shape index: {}]
  %s3 = inlined_call_operand.vmem [shape: bf16[512,32], index: 3, kind: output, shape index: {}]
  %s4 = sld [smem:[#allocation0]]
  $region22: #{tpu_custom_call.1} parent=0
    _
  %s6 = ssub.s32 1, %s4
  %s7 = scalar_select 0, %s6, %s4
  // Predicated region
  $region2: #{tpu_custom_call.1} parent=0 // pred_check
    _
  $region3: #{tpu_custom_call.1} parent=0 // pred_check_branch
    %9 = sbr.rel (0) target = $region5
  $region4: #{tpu_custom_call.1} parent=0 // pred_region
    _
  $region5: #{tpu_custom_call.1} parent=0 // pred_fallthru
    _
  // Predicated region
  $region6: #{tpu_custom_call.1} parent=0 // pred_check
    _
  $region7: #{tpu_custom_call.1} parent=0 // pred_check_branch
    %11 = sbr.rel (0) target = $region9
  $region8: #{tpu_custom_call.1} parent=0 // pred_region
    _
  $region9: #{tpu_custom_call.1} parent=0 // pred_fallthru
    _
  // Predicated region
  $region10: #{tpu_custom_call.1} parent=0 // pred_check
    _
  $region11: #{tpu_custom_call.1} parent=0 // pred_check_branch
    %13 = sbr.rel (0) target = $region13
  $region12: #{tpu_custom_call.1} parent=0 // pred_region
    _
  $region13: #{tpu_custom_call.1} parent=0 // pred_fallthru
    _
  %v15 = vld [vmem:[%s0] sm:$0xf]
  %v16 = vld [vmem:[%s0 + $0x4] sm:$0xf]
  %v17 = vld [vmem:[%s0 + $0x8] sm:$0xf]
  %v18 = vld [vmem:[%s0 + $0xc] sm:$0xf]
  %v19 = vld [vmem:[%s0 + $0x10] sm:$0xf]
  %v20 = vld [vmem:[%s0 + $0x14] sm:$0xf]
  %v21 = vld [vmem:[%s0 + $0x18] sm:$0xf]
  %v22 = vld [vmem:[%s0 + $0x1c] sm:$0xf]
  %v23 = vld [vmem:[%s0 + $0x20] sm:$0xf]
  %v24 = vld [vmem:[%s0 + $0x24] sm:$0xf]
  %v25 = vld [vmem:[%s0 + $0x28] sm:$0xf]
  %v26 = vld [vmem:[%s0 + $0x2c] sm:$0xf]
  %v27 = vld [vmem:[%s0 + $0x30] sm:$0xf]
  %v28 = vld [vmem:[%s0 + $0x34] sm:$0xf]
  %v29 = vld [vmem:[%s0 + $0x38] sm:$0xf]
  %v30 = vld [vmem:[%s0 + $0x3c] sm:$0xf]
  %v31 = vld [vmem:[%s0 + $0x40] sm:$0xf]
  %v32 = vld [vmem:[%s0 + $0x44] sm:$0xf]
  %v33 = vld [vmem:[%s0 + $0x48] sm:$0xf]
  %v34 = vld [vmem:[%s0 + $0x4c] sm:$0xf]
  %v35 = vld [vmem:[%s0 + $0x50] sm:$0xf]
  %v36 = vld [vmem:[%s0 + $0x54] sm:$0xf]
  %v37 = vld [vmem:[%s0 + $0x58] sm:$0xf]
  %v38 = vld [vmem:[%s0 + $0x5c] sm:$0xf]
  %v39 = vld [vmem:[%s0 + $0x60] sm:$0xf]
  %v40 = vld [vmem:[%s0 + $0x64] sm:$0xf]
  %v41 = vld [vmem:[%s0 + $0x68] sm:$0xf]
  %v42 = vld [vmem:[%s0 + $0x6c] sm:$0xf]
  %v43 = vld [vmem:[%s0 + $0x70] sm:$0xf]
  %v44 = vld [vmem:[%s0 + $0x74] sm:$0xf]
  %v45 = vld [vmem:[%s0 + $0x78] sm:$0xf]
  %v46 = vld [vmem:[%s0 + $0x7c] sm:$0xf]
  %v47 = vld [vmem:[%s0 + $0x80] sm:$0xf]
  %v48 = vld [vmem:[%s0 + $0x84] sm:$0xf]
  %v49 = vld [vmem:[%s0 + $0x88] sm:$0xf]
  %v50 = vld [vmem:[%s0 + $0x8c] sm:$0xf]
  %v51 = vld [vmem:[%s0 + $0x90] sm:$0xf]
  %v52 = vld [vmem:[%s0 + $0x94] sm:$0xf]
  %v53 = vld [vmem:[%s0 + $0x98] sm:$0xf]
  %v54 = vld [vmem:[%s0 + $0x9c] sm:$0xf]
  %v55 = vld [vmem:[%s0 + $0xa0] sm:$0xf]
  %v56 = vld [vmem:[%s0 + $0xa4] sm:$0xf]
  %v57 = vld [vmem:[%s0 + $0xa8] sm:$0xf]
  %v58 = vld [vmem:[%s0 + $0xac] sm:$0xf]
  %v59 = vld [vmem:[%s0 + $0xb0] sm:$0xf]
  %v60 = vld [vmem:[%s0 + $0xb4] sm:$0xf]
  %v61 = vld [vmem:[%s0 + $0xb8] sm:$0xf]
  %v62 = vld [vmem:[%s0 + $0xbc] sm:$0xf]
  %v63 = vld [vmem:[%s0 + $0xc0] sm:$0xf]
  %v64 = vld [vmem:[%s0 + $0xc4] sm:$0xf]
  %v65 = vld [vmem:[%s0 + $0xc8] sm:$0xf]
  %v66 = vld [vmem:[%s0 + $0xcc] sm:$0xf]
  %v67 = vld [vmem:[%s0 + $0xd0] sm:$0xf]
  %v68 = vld [vmem:[%s0 + $0xd4] sm:$0xf]
  %v69 = vld [vmem:[%s0 + $0xd8] sm:$0xf]
  %v70 = vld [vmem:[%s0 + $0xdc] sm:$0xf]
  %v71 = vld [vmem:[%s0 + $0xe0] sm:$0xf]
  %v72 = vld [vmem:[%s0 + $0xe4] sm:$0xf]
  %v73 = vld [vmem:[%s0 + $0xe8] sm:$0xf]
  %v74 = vld [vmem:[%s0 + $0xec] sm:$0xf]
  %v75 = vld [vmem:[%s0 + $0xf0] sm:$0xf]
  %v76 = vld [vmem:[%s0 + $0xf4] sm:$0xf]
  %v77 = vld [vmem:[%s0 + $0xf8] sm:$0xf]
  %v78 = vld [vmem:[%s0 + $0xfc] sm:$0xf]
  %v79 = vld [vmem:[%s1] sm:$0xf]
  %v80 = vld [vmem:[%s1 + $0x4] sm:$0xf]
  %v81 = vld [vmem:[%s1 + $0x8] sm:$0xf]
  %v82 = vld [vmem:[%s1 + $0xc] sm:$0x3]
  %v83 = vld [vmem:[%s2] sm:$0x1]
  %v85 = vlaneseq
  %v86 = vshrl.u32 %v85, 7
  %v87 = vsub.s32 0, %v86
  %v88 = vrot.slane %v83, %v87
  %v154 = vunpack.c.l.b16 %v15
  %v155 = vunpack.c.l.b16 %v16
  %v156 = vunpack.c.l.b16 %v17
  %v157 = vunpack.c.l.b16 %v18
  %v158 = vunpack.c.l.b16 %v19
  %v159 = vunpack.c.l.b16 %v20
  %v160 = vunpack.c.l.b16 %v21
  %v161 = vunpack.c.l.b16 %v22
  %v162 = vunpack.c.l.b16 %v23
  %v163 = vunpack.c.l.b16 %v24
  %v164 = vunpack.c.l.b16 %v25
  %v165 = vunpack.c.l.b16 %v26
  %v166 = vunpack.c.l.b16 %v27
  %v167 = vunpack.c.l.b16 %v28
  %v168 = vunpack.c.l.b16 %v29
  %v169 = vunpack.c.l.b16 %v30
  %v170 = vunpack.c.l.b16 %v31
  %v171 = vunpack.c.l.b16 %v32
  %v172 = vunpack.c.l.b16 %v33
  %v173 = vunpack.c.l.b16 %v34
  %v174 = vunpack.c.l.b16 %v35
  %v175 = vunpack.c.l.b16 %v36
  %v176 = vunpack.c.l.b16 %v37
  %v177 = vunpack.c.l.b16 %v38
  %v178 = vunpack.c.l.b16 %v39
  %v179 = vunpack.c.l.b16 %v40
  %v180 = vunpack.c.l.b16 %v41
  %v181 = vunpack.c.l.b16 %v42
  %v182 = vunpack.c.l.b16 %v43
  %v183 = vunpack.c.l.b16 %v44
  %v184 = vunpack.c.l.b16 %v45
  %v185 = vunpack.c.l.b16 %v46
  %v186 = vunpack.c.l.b16 %v47
  %v187 = vunpack.c.l.b16 %v48
  %v188 = vunpack.c.l.b16 %v49
  %v189 = vunpack.c.l.b16 %v50
  %v190 = vunpack.c.l.b16 %v51
  %v191 = vunpack.c.l.b16 %v52
  %v192 = vunpack.c.l.b16 %v53
  %v193 = vunpack.c.l.b16 %v54
  %v194 = vunpack.c.l.b16 %v55
  %v195 = vunpack.c.l.b16 %v56
  %v196 = vunpack.c.l.b16 %v57
  %v197 = vunpack.c.l.b16 %v58
  %v198 = vunpack.c.l.b16 %v59
  %v199 = vunpack.c.l.b16 %v60
  %v200 = vunpack.c.l.b16 %v61
  %v201 = vunpack.c.l.b16 %v62
  %v202 = vunpack.c.l.b16 %v63
  %v203 = vunpack.c.l.b16 %v64
  %v204 = vunpack.c.l.b16 %v65
  %v205 = vunpack.c.l.b16 %v66
  %v206 = vunpack.c.l.b16 %v67
  %v207 = vunpack.c.l.b16 %v68
  %v208 = vunpack.c.l.b16 %v69
  %v209 = vunpack.c.l.b16 %v70
  %v210 = vunpack.c.l.b16 %v71
  %v211 = vunpack.c.l.b16 %v72
  %v212 = vunpack.c.l.b16 %v73
  %v213 = vunpack.c.l.b16 %v74
  %v214 = vunpack.c.l.b16 %v75
  %v215 = vunpack.c.l.b16 %v76
  %v216 = vunpack.c.l.b16 %v77
  %v217 = vunpack.c.l.b16 %v78
  %v218 = vpack.c.b16 %v155, %v154
  %v219 = vpack.c.b16 %v157, %v156
  %v220 = vpack.c.b16 %v159, %v158
  %v221 = vpack.c.b16 %v161, %v160
  %v222 = vpack.c.b16 %v163, %v162
  %v223 = vpack.c.b16 %v165, %v164
  %v224 = vpack.c.b16 %v167, %v166
  %v225 = vpack.c.b16 %v169, %v168
  %v226 = vpack.c.b16 %v171, %v170
  %v227 = vpack.c.b16 %v173, %v172
  %v228 = vpack.c.b16 %v175, %v174
  %v229 = vpack.c.b16 %v177, %v176
  %v230 = vpack.c.b16 %v179, %v178
  %v231 = vpack.c.b16 %v181, %v180
  %v232 = vpack.c.b16 %v183, %v182
  %v233 = vpack.c.b16 %v185, %v184
  %v234 = vpack.c.b16 %v187, %v186
  %v235 = vpack.c.b16 %v189, %v188
  %v236 = vpack.c.b16 %v191, %v190
  %v237 = vpack.c.b16 %v193, %v192
  %v238 = vpack.c.b16 %v195, %v194
  %v239 = vpack.c.b16 %v197, %v196
  %v240 = vpack.c.b16 %v199, %v198
  %v241 = vpack.c.b16 %v201, %v200
  %v242 = vpack.c.b16 %v203, %v202
  %v243 = vpack.c.b16 %v205, %v204
  %v244 = vpack.c.b16 %v207, %v206
  %v245 = vpack.c.b16 %v209, %v208
  %v246 = vpack.c.b16 %v211, %v210
  %v247 = vpack.c.b16 %v213, %v212
  %v248 = vpack.c.b16 %v215, %v214
  %v249 = vpack.c.b16 %v217, %v216
  %v254 = vunpack.c.l.b16 %v79
  %v255 = vunpack.c.l.b16 %v80
  %v256 = vunpack.c.l.b16 %v81
  %v257 = vunpack.c.l.b16 %v82
  %v258 = vpack.c.b16 %v255, %v254
  %v259 = vpack.c.b16 %v257, %v256
  %vm261 = vcmask 220160
  %v263 = vsel %vm261, %v218, 0
  %v266 = vsel %vm261, %v219, 0
  %v269 = vsel %vm261, %v220, 0
  %v272 = vsel %vm261, %v221, 0
  %v275 = vsel %vm261, %v222, 0
  %v278 = vsel %vm261, %v223, 0
  %v281 = vsel %vm261, %v224, 0
  %v284 = vsel %vm261, %v225, 0
  %v287 = vsel %vm261, %v226, 0
  %v290 = vsel %vm261, %v227, 0
  %v293 = vsel %vm261, %v228, 0
  %v296 = vsel %vm261, %v229, 0
  %v299 = vsel %vm261, %v230, 0
  %v302 = vsel %vm261, %v231, 0
  %v305 = vsel %vm261, %v232, 0
  %v308 = vsel %vm261, %v233, 0
  %v311 = vsel %vm261, %v234, 0
  %v314 = vsel %vm261, %v235, 0
  %v317 = vsel %vm261, %v236, 0
  %v320 = vsel %vm261, %v237, 0
  %v323 = vsel %vm261, %v238, 0
  %v326 = vsel %vm261, %v239, 0
  %v329 = vsel %vm261, %v240, 0
  %v332 = vsel %vm261, %v241, 0
  %v335 = vsel %vm261, %v242, 0
  %v338 = vsel %vm261, %v243, 0
  %v341 = vsel %vm261, %v244, 0
  %v344 = vsel %vm261, %v245, 0
  %v347 = vsel %vm261, %v246, 0
  %v350 = vsel %vm261, %v247, 0
  %v353 = vsel %vm261, %v248, 0
  %v356 = vsel %vm261, %v249, 0
  %vm358 = vcmask 1044480
  %vm359 = vcmask 1045504
  %v360 = vsel %vm358, 4294967295, 65535
  %v361 = vsel %vm359, %v360, 0
  %v363 = vand.u32 %v259, %v361
  %365 = vmatprep.subr.bf16.mxu0 0
  %366 = vmatpush1.bf16.msra.mxu0 %v258
  %367 = vmatprep.subr.bf16.mxu0 0
  %368 = vmatpush1.bf16.msra.mxu0 %v363
  %369 = vmatprep.subr.bf16.mxu0 0
  %370 = vmatpush1.bf16.msra.mxu0 0
  %371 = vmatprep.subr.bf16.mxu0 0
  %372 = vmatpush1.bf16.msra.mxu0 0
  %373 = vmatprep.subr.bf16.mxu0 0
  %374 = vmatpush1.bf16.msra.mxu0 0
  %375 = vmatprep.subr.bf16.mxu0 0
  %376 = vmatpush1.bf16.msra.mxu0 0
  %377 = vmatprep.subr.bf16.mxu0 0
  %378 = vmatpush1.bf16.msra.mxu0 0
  %379 = vmatprep.subr.bf16.mxu0 0
  %380 = vmatpush1.bf16.msra.mxu0 0
  %381 = vmatprep.subr.bf16.mxu0 0
  %382 = vmatpush1.bf16.msra.mxu0 0
  %383 = vmatprep.subr.bf16.mxu0 0
  %384 = vmatpush1.bf16.msra.mxu0 0
  %385 = vmatprep.subr.bf16.mxu0 0
  %386 = vmatpush1.bf16.msra.mxu0 0
  %387 = vmatprep.subr.bf16.mxu0 0
  %388 = vmatpush1.bf16.msra.mxu0 0
  %389 = vmatprep.subr.bf16.mxu0 0
  %390 = vmatpush1.bf16.msra.mxu0 0
  %391 = vmatprep.subr.bf16.mxu0 0
  %392 = vmatpush1.bf16.msra.mxu0 0
  %393 = vmatprep.subr.bf16.mxu0 0
  %394 = vmatpush1.bf16.msra.mxu0 0
  %395 = vmatprep.subr.bf16.mxu0 0
  %396 = vmatpush1.bf16.msra.mxu0 0
  %397 = vmatprep.mubr.bf16.mxu0 0
  %398 = vmatmul.mubr.bf16.gmra.mrb[0].mxu0 %v263
  %v399 = vpop.f32.mrb[0].mxu0
  %v400 = vadd.f32 %v88, %v399
  %v401 = vpop.f32.mrb[0].mxu0
  %v402 = vpop.f32.mrb[0].mxu0
  %v403 = vadd.f32 %v88, %v402
  %v404 = vpop.f32.mrb[0].mxu0
  %405 = vmatprep.mubr.bf16.mxu0 0
  %406 = vmatmul.mubr.bf16.gmra.mrb[0].mxu0 %v266
  %v407 = vpop.f32.mrb[0].mxu0
  %v408 = vadd.f32 %v88, %v407
  %v409 = vpop.f32.mrb[0].mxu0
  %v410 = vpop.f32.mrb[0].mxu0
  %v411 = vadd.f32 %v88, %v410
  %v412 = vpop.f32.mrb[0].mxu0
  %413 = vmatprep.mubr.bf16.mxu0 0
  %414 = vmatmul.mubr.bf16.gmra.mrb[0].mxu0 %v269
  %v415 = vpop.f32.mrb[0].mxu0
  %v416 = vadd.f32 %v88, %v415
  %v417 = vpop.f32.mrb[0].mxu0
  %v418 = vpop.f32.mrb[0].mxu0
  %v419 = vadd.f32 %v88, %v418
  %v420 = vpop.f32.mrb[0].mxu0
  %421 = vmatprep.mubr.bf16.mxu0 0
  %422 = vmatmul.mubr.bf16.gmra.mrb[0].mxu0 %v272
  %v423 = vpop.f32.mrb[0].mxu0
  %v424 = vadd.f32 %v88, %v423
  %v425 = vpop.f32.mrb[0].mxu0
  %v426 = vpop.f32.mrb[0].mxu0
  %v427 = vadd.f32 %v88, %v426
  %v428 = vpop.f32.mrb[0].mxu0
  %429 = vmatprep.mubr.bf16.mxu0 0
  %430 = vmatmul.mubr.bf16.gmra.mrb[0].mxu0 %v275
  %v431 = vpop.f32.mrb[0].mxu0
  %v432 = vadd.f32 %v88, %v431
  %v433 = vpop.f32.mrb[0].mxu0
  %v434 = vpop.f32.mrb[0].mxu0
  %v435 = vadd.f32 %v88, %v434
  %v436 = vpop.f32.mrb[0].mxu0
  %437 = vmatprep.mubr.bf16.mxu0 0
  %438 = vmatmul.mubr.bf16.gmra.mrb[0].mxu0 %v278
  %v439 = vpop.f32.mrb[0].mxu0
  %v440 = vadd.f32 %v88, %v439
  %v441 = vpop.f32.mrb[0].mxu0
  %v442 = vpop.f32.mrb[0].mxu0
  %v443 = vadd.f32 %v88, %v442
  %v444 = vpop.f32.mrb[0].mxu0
  %445 = vmatprep.mubr.bf16.mxu0 0
  %446 = vmatmul.mubr.bf16.gmra.mrb[0].mxu0 %v281
  %v447 = vpop.f32.mrb[0].mxu0
  %v448 = vadd.f32 %v88, %v447
  %v449 = vpop.f32.mrb[0].mxu0
  %v450 = vpop.f32.mrb[0].mxu0
  %v451 = vadd.f32 %v88, %v450
  %v452 = vpop.f32.mrb[0].mxu0
  %453 = vmatprep.mubr.bf16.mxu0 0
  %454 = vmatmul.mubr.bf16.gmra.mrb[0].mxu0 %v284
  %v455 = vpop.f32.mrb[0].mxu0
  %v456 = vadd.f32 %v88, %v455
  %v457 = vpop.f32.mrb[0].mxu0
  %v458 = vpop.f32.mrb[0].mxu0
  %v459 = vadd.f32 %v88, %v458
  %v460 = vpop.f32.mrb[0].mxu0
  %461 = vmatprep.mubr.bf16.mxu0 0
  %462 = vmatmul.mubr.bf16.gmra.mrb[0].mxu0 %v287
  %v463 = vpop.f32.mrb[0].mxu0
  %v464 = vadd.f32 %v88, %v463
  %v465 = vpop.f32.mrb[0].mxu0
  %v466 = vpop.f32.mrb[0].mxu0
  %v467 = vadd.f32 %v88, %v466
  %v468 = vpop.f32.mrb[0].mxu0
  %469 = vmatprep.mubr.bf16.mxu0 0
  %470 = vmatmul.mubr.bf16.gmra.mrb[0].mxu0 %v290
  %v471 = vpop.f32.mrb[0].mxu0
  %v472 = vadd.f32 %v88, %v471
  %v473 = vpop.f32.mrb[0].mxu0
  %v474 = vpop.f32.mrb[0].mxu0
  %v475 = vadd.f32 %v88, %v474
  %v476 = vpop.f32.mrb[0].mxu0
  %477 = vmatprep.mubr.bf16.mxu0 0
  %478 = vmatmul.mubr.bf16.gmra.mrb[0].mxu0 %v293
  %v479 = vpop.f32.mrb[0].mxu0
  %v480 = vadd.f32 %v88, %v479
  %v481 = vpop.f32.mrb[0].mxu0
  %v482 = vpop.f32.mrb[0].mxu0
  %v483 = vadd.f32 %v88, %v482
  %v484 = vpop.f32.mrb[0].mxu0
  %485 = vmatprep.mubr.bf16.mxu0 0
  %486 = vmatmul.mubr.bf16.gmra.mrb[0].mxu0 %v296
  %v487 = vpop.f32.mrb[0].mxu0
  %v488 = vadd.f32 %v88, %v487
  %v489 = vpop.f32.mrb[0].mxu0
  %v490 = vpop.f32.mrb[0].mxu0
  %v491 = vadd.f32 %v88, %v490
  %v492 = vpop.f32.mrb[0].mxu0
  %493 = vmatprep.mubr.bf16.mxu0 0
  %494 = vmatmul.mubr.bf16.gmra.mrb[0].mxu0 %v299
  %v495 = vpop.f32.mrb[0].mxu0
  %v496 = vadd.f32 %v88, %v495
  %v497 = vpop.f32.mrb[0].mxu0
  %v498 = vpop.f32.mrb[0].mxu0
  %v499 = vadd.f32 %v88, %v498
  %v500 = vpop.f32.mrb[0].mxu0
  %501 = vmatprep.mubr.bf16.mxu0 0
  %502 = vmatmul.mubr.bf16.gmra.mrb[0].mxu0 %v302
  %v503 = vpop.f32.mrb[0].mxu0
  %v504 = vadd.f32 %v88, %v503
  %v505 = vpop.f32.mrb[0].mxu0
  %v506 = vpop.f32.mrb[0].mxu0
  %v507 = vadd.f32 %v88, %v506
  %v508 = vpop.f32.mrb[0].mxu0
  %509 = vmatprep.mubr.bf16.mxu0 0
  %510 = vmatmul.mubr.bf16.gmra.mrb[0].mxu0 %v305
  %v511 = vpop.f32.mrb[0].mxu0
  %v512 = vadd.f32 %v88, %v511
  %v513 = vpop.f32.mrb[0].mxu0
  %v514 = vpop.f32.mrb[0].mxu0
  %v515 = vadd.f32 %v88, %v514
  %v516 = vpop.f32.mrb[0].mxu0
  %517 = vmatprep.mubr.bf16.mxu0 0
  %518 = vmatmul.mubr.bf16.gmra.mrb[0].mxu0 %v308
  %v519 = vpop.f32.mrb[0].mxu0
  %v520 = vadd.f32 %v88, %v519
  %v521 = vpop.f32.mrb[0].mxu0
  %v522 = vpop.f32.mrb[0].mxu0
  %v523 = vadd.f32 %v88, %v522
  %v524 = vpop.f32.mrb[0].mxu0
  %525 = vmatprep.mubr.bf16.mxu0 0
  %526 = vmatmul.mubr.bf16.gmra.mrb[0].mxu0 %v311
  %v527 = vpop.f32.mrb[0].mxu0
  %v528 = vadd.f32 %v88, %v527
  %v529 = vpop.f32.mrb[0].mxu0
  %v530 = vpop.f32.mrb[0].mxu0
  %v531 = vadd.f32 %v88, %v530
  %v532 = vpop.f32.mrb[0].mxu0
  %533 = vmatprep.mubr.bf16.mxu0 0
  %534 = vmatmul.mubr.bf16.gmra.mrb[0].mxu0 %v314
  %v535 = vpop.f32.mrb[0].mxu0
  %v536 = vadd.f32 %v88, %v535
  %v537 = vpop.f32.mrb[0].mxu0
  %v538 = vpop.f32.mrb[0].mxu0
  %v539 = vadd.f32 %v88, %v538
  %v540 = vpop.f32.mrb[0].mxu0
  %541 = vmatprep.mubr.bf16.mxu0 0
  %542 = vmatmul.mubr.bf16.gmra.mrb[0].mxu0 %v317
  %v543 = vpop.f32.mrb[0].mxu0
  %v544 = vadd.f32 %v88, %v543
  %v545 = vpop.f32.mrb[0].mxu0
  %v546 = vpop.f32.mrb[0].mxu0
  %v547 = vadd.f32 %v88, %v546
  %v548 = vpop.f32.mrb[0].mxu0
  %549 = vmatprep.mubr.bf16.mxu0 0
  %550 = vmatmul.mubr.bf16.gmra.mrb[0].mxu0 %v320
  %v551 = vpop.f32.mrb[0].mxu0
  %v552 = vadd.f32 %v88, %v551
  %v553 = vpop.f32.mrb[0].mxu0
  %v554 = vpop.f32.mrb[0].mxu0
  %v555 = vadd.f32 %v88, %v554
  %v556 = vpop.f32.mrb[0].mxu0
  %557 = vmatprep.mubr.bf16.mxu0 0
  %558 = vmatmul.mubr.bf16.gmra.mrb[0].mxu0 %v323
  %v559 = vpop.f32.mrb[0].mxu0
  %v560 = vadd.f32 %v88, %v559
  %v561 = vpop.f32.mrb[0].mxu0
  %v562 = vpop.f32.mrb[0].mxu0
  %v563 = vadd.f32 %v88, %v562
  %v564 = vpop.f32.mrb[0].mxu0
  %565 = vmatprep.mubr.bf16.mxu0 0
  %566 = vmatmul.mubr.bf16.gmra.mrb[0].mxu0 %v326
  %v567 = vpop.f32.mrb[0].mxu0
  %v568 = vadd.f32 %v88, %v567
  %v569 = vpop.f32.mrb[0].mxu0
  %v570 = vpop.f32.mrb[0].mxu0
  %v571 = vadd.f32 %v88, %v570
  %v572 = vpop.f32.mrb[0].mxu0
  %573 = vmatprep.mubr.bf16.mxu0 0
  %574 = vmatmul.mubr.bf16.gmra.mrb[0].mxu0 %v329
  %v575 = vpop.f32.mrb[0].mxu0
  %v576 = vadd.f32 %v88, %v575
  %v577 = vpop.f32.mrb[0].mxu0
  %v578 = vpop.f32.mrb[0].mxu0
  %v579 = vadd.f32 %v88, %v578
  %v580 = vpop.f32.mrb[0].mxu0
  %581 = vmatprep.mubr.bf16.mxu0 0
  %582 = vmatmul.mubr.bf16.gmra.mrb[0].mxu0 %v332
  %v583 = vpop.f32.mrb[0].mxu0
  %v584 = vadd.f32 %v88, %v583
  %v585 = vpop.f32.mrb[0].mxu0
  %v586 = vpop.f32.mrb[0].mxu0
  %v587 = vadd.f32 %v88, %v586
  %v588 = vpop.f32.mrb[0].mxu0
  %589 = vmatprep.mubr.bf16.mxu0 0
  %590 = vmatmul.mubr.bf16.gmra.mrb[0].mxu0 %v335
  %v591 = vpop.f32.mrb[0].mxu0
  %v592 = vadd.f32 %v88, %v591
  %v593 = vpop.f32.mrb[0].mxu0
  %v594 = vpop.f32.mrb[0].mxu0
  %v595 = vadd.f32 %v88, %v594
  %v596 = vpop.f32.mrb[0].mxu0
  %597 = vmatprep.mubr.bf16.mxu0 0
  %598 = vmatmul.mubr.bf16.gmra.mrb[0].mxu0 %v338
  %v599 = vpop.f32.mrb[0].mxu0
  %v600 = vadd.f32 %v88, %v599
  %v601 = vpop.f32.mrb[0].mxu0
  %v602 = vpop.f32.mrb[0].mxu0
  %v603 = vadd.f32 %v88, %v602
  %v604 = vpop.f32.mrb[0].mxu0
  %605 = vmatprep.mubr.bf16.mxu0 0
  %606 = vmatmul.mubr.bf16.gmra.mrb[0].mxu0 %v341
  %v607 = vpop.f32.mrb[0].mxu0
  %v608 = vadd.f32 %v88, %v607
  %v609 = vpop.f32.mrb[0].mxu0
  %v610 = vpop.f32.mrb[0].mxu0
  %v611 = vadd.f32 %v88, %v610
  %v612 = vpop.f32.mrb[0].mxu0
  %613 = vmatprep.mubr.bf16.mxu0 0
  %614 = vmatmul.mubr.bf16.gmra.mrb[0].mxu0 %v344
  %v615 = vpop.f32.mrb[0].mxu0
  %v616 = vadd.f32 %v88, %v615
  %v617 = vpop.f32.mrb[0].mxu0
  %v618 = vpop.f32.mrb[0].mxu0
  %v619 = vadd.f32 %v88, %v618
  %v620 = vpop.f32.mrb[0].mxu0
  %621 = vmatprep.mubr.bf16.mxu0 0
  %622 = vmatmul.mubr.bf16.gmra.mrb[0].mxu0 %v347
  %v623 = vpop.f32.mrb[0].mxu0
  %v624 = vadd.f32 %v88, %v623
  %v625 = vpop.f32.mrb[0].mxu0
  %v626 = vpop.f32.mrb[0].mxu0
  %v627 = vadd.f32 %v88, %v626
  %v628 = vpop.f32.mrb[0].mxu0
  %629 = vmatprep.mubr.bf16.mxu0 0
  %630 = vmatmul.mubr.bf16.gmra.mrb[0].mxu0 %v350
  %v631 = vpop.f32.mrb[0].mxu0
  %v632 = vadd.f32 %v88, %v631
  %v633 = vpop.f32.mrb[0].mxu0
  %v634 = vpop.f32.mrb[0].mxu0
  %v635 = vadd.f32 %v88, %v634
  %v636 = vpop.f32.mrb[0].mxu0
  %637 = vmatprep.mubr.bf16.mxu0 0
  %638 = vmatmul.mubr.bf16.gmra.mrb[0].mxu0 %v353
  %v639 = vpop.f32.mrb[0].mxu0
  %v640 = vadd.f32 %v88, %v639
  %v641 = vpop.f32.mrb[0].mxu0
  %v642 = vpop.f32.mrb[0].mxu0
  %v643 = vadd.f32 %v88, %v642
  %v644 = vpop.f32.mrb[0].mxu0
  %645 = vmatprep.mubr.bf16.mxu0 0
  %646 = vmatmul.mubr.bf16.gmra.mrb[0].mxu0 %v356
  %v647 = vpop.f32.mrb[0].mxu0
  %v648 = vadd.f32 %v88, %v647
  %v649 = vpop.f32.mrb[0].mxu0
  %v650 = vpop.f32.mrb[0].mxu0
  %v651 = vadd.f32 %v88, %v650
  %v652 = vpop.f32.mrb[0].mxu0
  %653 = vdwg.mxu0
  %v654 = vxor.u32 %v400, 2147483648
  %v655 = vxor.u32 %v403, 2147483648
  %v656 = vxor.u32 %v408, 2147483648
  %v657 = vxor.u32 %v411, 2147483648
  %v658 = vxor.u32 %v416, 2147483648
  %v659 = vxor.u32 %v419, 2147483648
  %v660 = vxor.u32 %v424, 2147483648
  %v661 = vxor.u32 %v427, 2147483648
  %v662 = vxor.u32 %v432, 2147483648
  %v663 = vxor.u32 %v435, 2147483648
  %v664 = vxor.u32 %v440, 2147483648
  %v665 = vxor.u32 %v443, 2147483648
  %v666 = vxor.u32 %v448, 2147483648
  %v667 = vxor.u32 %v451, 2147483648
  %v668 = vxor.u32 %v456, 2147483648
  %v669 = vxor.u32 %v459, 2147483648
  %v670 = vxor.u32 %v464, 2147483648
  %v671 = vxor.u32 %v467, 2147483648
  %v672 = vxor.u32 %v472, 2147483648
  %v673 = vxor.u32 %v475, 2147483648
  %v674 = vxor.u32 %v480, 2147483648
  %v675 = vxor.u32 %v483, 2147483648
  %v676 = vxor.u32 %v488, 2147483648
  %v677 = vxor.u32 %v491, 2147483648
  %v678 = vxor.u32 %v496, 2147483648
  %v679 = vxor.u32 %v499, 2147483648
  %v680 = vxor.u32 %v504, 2147483648
  %v681 = vxor.u32 %v507, 2147483648
  %v682 = vxor.u32 %v512, 2147483648
  %v683 = vxor.u32 %v515, 2147483648
  %v684 = vxor.u32 %v520, 2147483648
  %v685 = vxor.u32 %v523, 2147483648
  %v686 = vxor.u32 %v528, 2147483648
  %v687 = vxor.u32 %v531, 2147483648
  %v688 = vxor.u32 %v536, 2147483648
  %v689 = vxor.u32 %v539, 2147483648
  %v690 = vxor.u32 %v544, 2147483648
  %v691 = vxor.u32 %v547, 2147483648
  %v692 = vxor.u32 %v552, 2147483648
  %v693 = vxor.u32 %v555, 2147483648
  %v694 = vxor.u32 %v560, 2147483648
  %v695 = vxor.u32 %v563, 2147483648
  %v696 = vxor.u32 %v568, 2147483648
  %v697 = vxor.u32 %v571, 2147483648
  %v698 = vxor.u32 %v576, 2147483648
  %v699 = vxor.u32 %v579, 2147483648
  %v700 = vxor.u32 %v584, 2147483648
  %v701 = vxor.u32 %v587, 2147483648
  %v702 = vxor.u32 %v592, 2147483648
  %v703 = vxor.u32 %v595, 2147483648
  %v704 = vxor.u32 %v600, 2147483648
  %v705 = vxor.u32 %v603, 2147483648
  %v706 = vxor.u32 %v608, 2147483648
  %v707 = vxor.u32 %v611, 2147483648
  %v708 = vxor.u32 %v616, 2147483648
  %v709 = vxor.u32 %v619, 2147483648
  %v710 = vxor.u32 %v624, 2147483648
  %v711 = vxor.u32 %v627, 2147483648
  %v712 = vxor.u32 %v632, 2147483648
  %v713 = vxor.u32 %v635, 2147483648
  %v714 = vxor.u32 %v640, 2147483648
  %v715 = vxor.u32 %v643, 2147483648
  %v716 = vxor.u32 %v648, 2147483648
  %v717 = vxor.u32 %v651, 2147483648
  %v718 = vmul.f32 %v654, 1.442695
  %v719 = vpow.pop %v718
  %v720 = vmul.f32 %v655, 1.442695
  %v721 = vpow.pop %v720
  %v722 = vmul.f32 %v656, 1.442695
  %v723 = vpow.pop %v722
  %v724 = vmul.f32 %v657, 1.442695
  %v725 = vpow.pop %v724
  %v726 = vmul.f32 %v658, 1.442695
  %v727 = vpow.pop %v726
  %v728 = vmul.f32 %v659, 1.442695
  %v729 = vpow.pop %v728
  %v730 = vmul.f32 %v660, 1.442695
  %v731 = vpow.pop %v730
  %v732 = vmul.f32 %v661, 1.442695
  %v733 = vpow.pop %v732
  %v734 = vmul.f32 %v662, 1.442695
  %v735 = vpow.pop %v734
  %v736 = vmul.f32 %v663, 1.442695
  %v737 = vpow.pop %v736
  %v738 = vmul.f32 %v664, 1.442695
  %v739 = vpow.pop %v738
  %v740 = vmul.f32 %v665, 1.442695
  %v741 = vpow.pop %v740
  %v742 = vmul.f32 %v666, 1.442695
  %v743 = vpow.pop %v742
  %v744 = vmul.f32 %v667, 1.442695
  %v745 = vpow.pop %v744
  %v746 = vmul.f32 %v668, 1.442695
  %v747 = vpow.pop %v746
  %v748 = vmul.f32 %v669, 1.442695
  %v749 = vpow.pop %v748
  %v750 = vmul.f32 %v670, 1.442695
  %v751 = vpow.pop %v750
  %v752 = vmul.f32 %v671, 1.442695
  %v753 = vpow.pop %v752
  %v754 = vmul.f32 %v672, 1.442695
  %v755 = vpow.pop %v754
  %v756 = vmul.f32 %v673, 1.442695
  %v757 = vpow.pop %v756
  %v758 = vmul.f32 %v674, 1.442695
  %v759 = vpow.pop %v758
  %v760 = vmul.f32 %v675, 1.442695
  %v761 = vpow.pop %v760
  %v762 = vmul.f32 %v676, 1.442695
  %v763 = vpow.pop %v762
  %v764 = vmul.f32 %v677, 1.442695
  %v765 = vpow.pop %v764
  %v766 = vmul.f32 %v678, 1.442695
  %v767 = vpow.pop %v766
  %v768 = vmul.f32 %v679, 1.442695
  %v769 = vpow.pop %v768
  %v770 = vmul.f32 %v680, 1.442695
  %v771 = vpow.pop %v770
  %v772 = vmul.f32 %v681, 1.442695
  %v773 = vpow.pop %v772
  %v774 = vmul.f32 %v682, 1.442695
  %v775 = vpow.pop %v774
  %v776 = vmul.f32 %v683, 1.442695
  %v777 = vpow.pop %v776
  %v778 = vmul.f32 %v684, 1.442695
  %v779 = vpow.pop %v778
  %v780 = vmul.f32 %v685, 1.442695
  %v781 = vpow.pop %v780
  %v782 = vmul.f32 %v686, 1.442695
  %v783 = vpow.pop %v782
  %v784 = vmul.f32 %v687, 1.442695
  %v785 = vpow.pop %v784
  %v786 = vmul.f32 %v688, 1.442695
  %v787 = vpow.pop %v786
  %v788 = vmul.f32 %v689, 1.442695
  %v789 = vpow.pop %v788
  %v790 = vmul.f32 %v690, 1.442695
  %v791 = vpow.pop %v790
  %v792 = vmul.f32 %v691, 1.442695
  %v793 = vpow.pop %v792
  %v794 = vmul.f32 %v692, 1.442695
  %v795 = vpow.pop %v794
  %v796 = vmul.f32 %v693, 1.442695
  %v797 = vpow.pop %v796
  %v798 = vmul.f32 %v694, 1.442695
  %v799 = vpow.pop %v798
  %v800 = vmul.f32 %v695, 1.442695
  %v801 = vpow.pop %v800
  %v802 = vmul.f32 %v696, 1.442695
  %v803 = vpow.pop %v802
  %v804 = vmul.f32 %v697, 1.442695
  %v805 = vpow.pop %v804
  %v806 = vmul.f32 %v698, 1.442695
  %v807 = vpow.pop %v806
  %v808 = vmul.f32 %v699, 1.442695
  %v809 = vpow.pop %v808
  %v810 = vmul.f32 %v700, 1.442695
  %v811 = vpow.pop %v810
  %v812 = vmul.f32 %v701, 1.442695
  %v813 = vpow.pop %v812
  %v814 = vmul.f32 %v702, 1.442695
  %v815 = vpow.pop %v814
  %v816 = vmul.f32 %v703, 1.442695
  %v817 = vpow.pop %v816
  %v818 = vmul.f32 %v704, 1.442695
  %v819 = vpow.pop %v818
  %v820 = vmul.f32 %v705, 1.442695
  %v821 = vpow.pop %v820
  %v822 = vmul.f32 %v706, 1.442695
  %v823 = vpow.pop %v822
  %v824 = vmul.f32 %v707, 1.442695
  %v825 = vpow.pop %v824
  %v826 = vmul.f32 %v708, 1.442695
  %v827 = vpow.pop %v826
  %v828 = vmul.f32 %v709, 1.442695
  %v829 = vpow.pop %v828
  %v830 = vmul.f32 %v710, 1.442695
  %v831 = vpow.pop %v830
  %v832 = vmul.f32 %v711, 1.442695
  %v833 = vpow.pop %v832
  %v834 = vmul.f32 %v712, 1.442695
  %v835 = vpow.pop %v834
  %v836 = vmul.f32 %v713, 1.442695
  %v837 = vpow.pop %v836
  %v838 = vmul.f32 %v714, 1.442695
  %v839 = vpow.pop %v838
  %v840 = vmul.f32 %v715, 1.442695
  %v841 = vpow.pop %v840
  %v842 = vmul.f32 %v716, 1.442695
  %v843 = vpow.pop %v842
  %v844 = vmul.f32 %v717, 1.442695
  %v845 = vpow.pop %v844
  %v846 = vadd.f32 %v719, 1.0
  %v847 = vadd.f32 %v721, 1.0
  %v848 = vadd.f32 %v723, 1.0
  %v849 = vadd.f32 %v725, 1.0
  %v850 = vadd.f32 %v727, 1.0
  %v851 = vadd.f32 %v729, 1.0
  %v852 = vadd.f32 %v731, 1.0
  %v853 = vadd.f32 %v733, 1.0
  %v854 = vadd.f32 %v735, 1.0
  %v855 = vadd.f32 %v737, 1.0
  %v856 = vadd.f32 %v739, 1.0
  %v857 = vadd.f32 %v741, 1.0
  %v858 = vadd.f32 %v743, 1.0
  %v859 = vadd.f32 %v745, 1.0
  %v860 = vadd.f32 %v747, 1.0
  %v861 = vadd.f32 %v749, 1.0
  %v862 = vadd.f32 %v751, 1.0
  %v863 = vadd.f32 %v753, 1.0
  %v864 = vadd.f32 %v755, 1.0
  %v865 = vadd.f32 %v757, 1.0
  %v866 = vadd.f32 %v759, 1.0
  %v867 = vadd.f32 %v761, 1.0
  %v868 = vadd.f32 %v763, 1.0
  %v869 = vadd.f32 %v765, 1.0
  %v870 = vadd.f32 %v767, 1.0
  %v871 = vadd.f32 %v769, 1.0
  %v872 = vadd.f32 %v771, 1.0
  %v873 = vadd.f32 %v773, 1.0
  %v874 = vadd.f32 %v775, 1.0
  %v875 = vadd.f32 %v777, 1.0
  %v876 = vadd.f32 %v779, 1.0
  %v877 = vadd.f32 %v781, 1.0
  %v878 = vadd.f32 %v783, 1.0
  %v879 = vadd.f32 %v785, 1.0
  %v880 = vadd.f32 %v787, 1.0
  %v881 = vadd.f32 %v789, 1.0
  %v882 = vadd.f32 %v791, 1.0
  %v883 = vadd.f32 %v793, 1.0
  %v884 = vadd.f32 %v795, 1.0
  %v885 = vadd.f32 %v797, 1.0
  %v886 = vadd.f32 %v799, 1.0
  %v887 = vadd.f32 %v801, 1.0
  %v888 = vadd.f32 %v803, 1.0
  %v889 = vadd.f32 %v805, 1.0
  %v890 = vadd.f32 %v807, 1.0
  %v891 = vadd.f32 %v809, 1.0
  %v892 = vadd.f32 %v811, 1.0
  %v893 = vadd.f32 %v813, 1.0
  %v894 = vadd.f32 %v815, 1.0
  %v895 = vadd.f32 %v817, 1.0
  %v896 = vadd.f32 %v819, 1.0
  %v897 = vadd.f32 %v821, 1.0
  %v898 = vadd.f32 %v823, 1.0
  %v899 = vadd.f32 %v825, 1.0
  %v900 = vadd.f32 %v827, 1.0
  %v901 = vadd.f32 %v829, 1.0
  %v902 = vadd.f32 %v831, 1.0
  %v903 = vadd.f32 %v833, 1.0
  %v904 = vadd.f32 %v835, 1.0
  %v905 = vadd.f32 %v837, 1.0
  %v906 = vadd.f32 %v839, 1.0
  %v907 = vadd.f32 %v841, 1.0
  %v908 = vadd.f32 %v843, 1.0
  %v909 = vadd.f32 %v845, 1.0
  %v910 = vrcp.pop %v846
  %v911 = vmul.f32 1.0, %v910
  %v912 = vrcp.pop %v847
  %v913 = vmul.f32 1.0, %v912
  %v914 = vrcp.pop %v848
  %v915 = vmul.f32 1.0, %v914
  %v916 = vrcp.pop %v849
  %v917 = vmul.f32 1.0, %v916
  %v918 = vrcp.pop %v850
  %v919 = vmul.f32 1.0, %v918
  %v920 = vrcp.pop %v851
  %v921 = vmul.f32 1.0, %v920
  %v922 = vrcp.pop %v852
  %v923 = vmul.f32 1.0, %v922
  %v924 = vrcp.pop %v853
  %v925 = vmul.f32 1.0, %v924
  %v926 = vrcp.pop %v854
  %v927 = vmul.f32 1.0, %v926
  %v928 = vrcp.pop %v855
  %v929 = vmul.f32 1.0, %v928
  %v930 = vrcp.pop %v856
  %v931 = vmul.f32 1.0, %v930
  %v932 = vrcp.pop %v857
  %v933 = vmul.f32 1.0, %v932
  %v934 = vrcp.pop %v858
  %v935 = vmul.f32 1.0, %v934
  %v936 = vrcp.pop %v859
  %v937 = vmul.f32 1.0, %v936
  %v938 = vrcp.pop %v860
  %v939 = vmul.f32 1.0, %v938
  %v940 = vrcp.pop %v861
  %v941 = vmul.f32 1.0, %v940
  %v942 = vrcp.pop %v862
  %v943 = vmul.f32 1.0, %v942
  %v944 = vrcp.pop %v863
  %v945 = vmul.f32 1.0, %v944
  %v946 = vrcp.pop %v864
  %v947 = vmul.f32 1.0, %v946
  %v948 = vrcp.pop %v865
  %v949 = vmul.f32 1.0, %v948
  %v950 = vrcp.pop %v866
  %v951 = vmul.f32 1.0, %v950
  %v952 = vrcp.pop %v867
  %v953 = vmul.f32 1.0, %v952
  %v954 = vrcp.pop %v868
  %v955 = vmul.f32 1.0, %v954
  %v956 = vrcp.pop %v869
  %v957 = vmul.f32 1.0, %v956
  %v958 = vrcp.pop %v870
  %v959 = vmul.f32 1.0, %v958
  %v960 = vrcp.pop %v871
  %v961 = vmul.f32 1.0, %v960
  %v962 = vrcp.pop %v872
  %v963 = vmul.f32 1.0, %v962
  %v964 = vrcp.pop %v873
  %v965 = vmul.f32 1.0, %v964
  %v966 = vrcp.pop %v874
  %v967 = vmul.f32 1.0, %v966
  %v968 = vrcp.pop %v875
  %v969 = vmul.f32 1.0, %v968
  %v970 = vrcp.pop %v876
  %v971 = vmul.f32 1.0, %v970
  %v972 = vrcp.pop %v877
  %v973 = vmul.f32 1.0, %v972
  %v974 = vrcp.pop %v878
  %v975 = vmul.f32 1.0, %v974
  %v976 = vrcp.pop %v879
  %v977 = vmul.f32 1.0, %v976
  %v978 = vrcp.pop %v880
  %v979 = vmul.f32 1.0, %v978
  %v980 = vrcp.pop %v881
  %v981 = vmul.f32 1.0, %v980
  %v982 = vrcp.pop %v882
  %v983 = vmul.f32 1.0, %v982
  %v984 = vrcp.pop %v883
  %v985 = vmul.f32 1.0, %v984
  %v986 = vrcp.pop %v884
  %v987 = vmul.f32 1.0, %v986
  %v988 = vrcp.pop %v885
  %v989 = vmul.f32 1.0, %v988
  %v990 = vrcp.pop %v886
  %v991 = vmul.f32 1.0, %v990
  %v992 = vrcp.pop %v887
  %v993 = vmul.f32 1.0, %v992
  %v994 = vrcp.pop %v888
  %v995 = vmul.f32 1.0, %v994
  %v996 = vrcp.pop %v889
  %v997 = vmul.f32 1.0, %v996
  %v998 = vrcp.pop %v890
  %v999 = vmul.f32 1.0, %v998
  %v1000 = vrcp.pop %v891
  %v1001 = vmul.f32 1.0, %v1000
  %v1002 = vrcp.pop %v892
  %v1003 = vmul.f32 1.0, %v1002
  %v1004 = vrcp.pop %v893
  %v1005 = vmul.f32 1.0, %v1004
  %v1006 = vrcp.pop %v894
  %v1007 = vmul.f32 1.0, %v1006
  %v1008 = vrcp.pop %v895
  %v1009 = vmul.f32 1.0, %v1008
  %v1010 = vrcp.pop %v896
  %v1011 = vmul.f32 1.0, %v1010
  %v1012 = vrcp.pop %v897
  %v1013 = vmul.f32 1.0, %v1012
  %v1014 = vrcp.pop %v898
  %v1015 = vmul.f32 1.0, %v1014
  %v1016 = vrcp.pop %v899
  %v1017 = vmul.f32 1.0, %v1016
  %v1018 = vrcp.pop %v900
  %v1019 = vmul.f32 1.0, %v1018
  %v1020 = vrcp.pop %v901
  %v1021 = vmul.f32 1.0, %v1020
  %v1022 = vrcp.pop %v902
  %v1023 = vmul.f32 1.0, %v1022
  %v1024 = vrcp.pop %v903
  %v1025 = vmul.f32 1.0, %v1024
  %v1026 = vrcp.pop %v904
  %v1027 = vmul.f32 1.0, %v1026
  %v1028 = vrcp.pop %v905
  %v1029 = vmul.f32 1.0, %v1028
  %v1030 = vrcp.pop %v906
  %v1031 = vmul.f32 1.0, %v1030
  %v1032 = vrcp.pop %v907
  %v1033 = vmul.f32 1.0, %v1032
  %v1034 = vrcp.pop %v908
  %v1035 = vmul.f32 1.0, %v1034
  %v1036 = vrcp.pop %v909
  %v1037 = vmul.f32 1.0, %v1036
  %v1038 = vmul.f32 %v400, %v911
  %v1039 = vmul.f32 %v403, %v913
  %v1040 = vmul.f32 %v408, %v915
  %v1041 = vmul.f32 %v411, %v917
  %v1042 = vmul.f32 %v416, %v919
  %v1043 = vmul.f32 %v419, %v921
  %v1044 = vmul.f32 %v424, %v923
  %v1045 = vmul.f32 %v427, %v925
  %v1046 = vmul.f32 %v432, %v927
  %v1047 = vmul.f32 %v435, %v929
  %v1048 = vmul.f32 %v440, %v931
  %v1049 = vmul.f32 %v443, %v933
  %v1050 = vmul.f32 %v448, %v935
  %v1051 = vmul.f32 %v451, %v937
  %v1052 = vmul.f32 %v456, %v939
  %v1053 = vmul.f32 %v459, %v941
  %v1054 = vmul.f32 %v464, %v943
  %v1055 = vmul.f32 %v467, %v945
  %v1056 = vmul.f32 %v472, %v947
  %v1057 = vmul.f32 %v475, %v949
  %v1058 = vmul.f32 %v480, %v951
  %v1059 = vmul.f32 %v483, %v953
  %v1060 = vmul.f32 %v488, %v955
  %v1061 = vmul.f32 %v491, %v957
  %v1062 = vmul.f32 %v496, %v959
  %v1063 = vmul.f32 %v499, %v961
  %v1064 = vmul.f32 %v504, %v963
  %v1065 = vmul.f32 %v507, %v965
  %v1066 = vmul.f32 %v512, %v967
  %v1067 = vmul.f32 %v515, %v969
  %v1068 = vmul.f32 %v520, %v971
  %v1069 = vmul.f32 %v523, %v973
  %v1070 = vmul.f32 %v528, %v975
  %v1071 = vmul.f32 %v531, %v977
  %v1072 = vmul.f32 %v536, %v979
  %v1073 = vmul.f32 %v539, %v981
  %v1074 = vmul.f32 %v544, %v983
  %v1075 = vmul.f32 %v547, %v985
  %v1076 = vmul.f32 %v552, %v987
  %v1077 = vmul.f32 %v555, %v989
  %v1078 = vmul.f32 %v560, %v991
  %v1079 = vmul.f32 %v563, %v993
  %v1080 = vmul.f32 %v568, %v995
  %v1081 = vmul.f32 %v571, %v997
  %v1082 = vmul.f32 %v576, %v999
  %v1083 = vmul.f32 %v579, %v1001
  %v1084 = vmul.f32 %v584, %v1003
  %v1085 = vmul.f32 %v587, %v1005
  %v1086 = vmul.f32 %v592, %v1007
  %v1087 = vmul.f32 %v595, %v1009
  %v1088 = vmul.f32 %v600, %v1011
  %v1089 = vmul.f32 %v603, %v1013
  %v1090 = vmul.f32 %v608, %v1015
  %v1091 = vmul.f32 %v611, %v1017
  %v1092 = vmul.f32 %v616, %v1019
  %v1093 = vmul.f32 %v619, %v1021
  %v1094 = vmul.f32 %v624, %v1023
  %v1095 = vmul.f32 %v627, %v1025
  %v1096 = vmul.f32 %v632, %v1027
  %v1097 = vmul.f32 %v635, %v1029
  %v1098 = vmul.f32 %v640, %v1031
  %v1099 = vmul.f32 %v643, %v1033
  %v1100 = vmul.f32 %v648, %v1035
  %v1101 = vmul.f32 %v651, %v1037
  %v1102 = vpack.c.bf16 %v1039, %v1038
  %v1103 = vpack.c.bf16 %v1041, %v1040
  %v1104 = vpack.c.bf16 %v1043, %v1042
  %v1105 = vpack.c.bf16 %v1045, %v1044
  %v1106 = vpack.c.bf16 %v1047, %v1046
  %v1107 = vpack.c.bf16 %v1049, %v1048
  %v1108 = vpack.c.bf16 %v1051, %v1050
  %v1109 = vpack.c.bf16 %v1053, %v1052
  %v1110 = vpack.c.bf16 %v1055, %v1054
  %v1111 = vpack.c.bf16 %v1057, %v1056
  %v1112 = vpack.c.bf16 %v1059, %v1058
  %v1113 = vpack.c.bf16 %v1061, %v1060
  %v1114 = vpack.c.bf16 %v1063, %v1062
  %v1115 = vpack.c.bf16 %v1065, %v1064
  %v1116 = vpack.c.bf16 %v1067, %v1066
  %v1117 = vpack.c.bf16 %v1069, %v1068
  %v1118 = vpack.c.bf16 %v1071, %v1070
  %v1119 = vpack.c.bf16 %v1073, %v1072
  %v1120 = vpack.c.bf16 %v1075, %v1074
  %v1121 = vpack.c.bf16 %v1077, %v1076
  %v1122 = vpack.c.bf16 %v1079, %v1078
  %v1123 = vpack.c.bf16 %v1081, %v1080
  %v1124 = vpack.c.bf16 %v1083, %v1082
  %v1125 = vpack.c.bf16 %v1085, %v1084
  %v1126 = vpack.c.bf16 %v1087, %v1086
  %v1127 = vpack.c.bf16 %v1089, %v1088
  %v1128 = vpack.c.bf16 %v1091, %v1090
  %v1129 = vpack.c.bf16 %v1093, %v1092
  %v1130 = vpack.c.bf16 %v1095, %v1094
  %v1131 = vpack.c.bf16 %v1097, %v1096
  %v1132 = vpack.c.bf16 %v1099, %v1098
  %v1133 = vpack.c.bf16 %v1101, %v1100
  %v1166 = vunpack.c.l.b16 %v1102
  %v1167 = vunpack.c.h.b16 %v1102
  %v1168 = vunpack.c.l.b16 %v1103
  %v1169 = vunpack.c.h.b16 %v1103
  %v1170 = vunpack.c.l.b16 %v1104
  %v1171 = vunpack.c.h.b16 %v1104
  %v1172 = vunpack.c.l.b16 %v1105
  %v1173 = vunpack.c.h.b16 %v1105
  %v1174 = vunpack.c.l.b16 %v1106
  %v1175 = vunpack.c.h.b16 %v1106
  %v1176 = vunpack.c.l.b16 %v1107
  %v1177 = vunpack.c.h.b16 %v1107
  %v1178 = vunpack.c.l.b16 %v1108
  %v1179 = vunpack.c.h.b16 %v1108
  %v1180 = vunpack.c.l.b16 %v1109
  %v1181 = vunpack.c.h.b16 %v1109
  %v1182 = vunpack.c.l.b16 %v1110
  %v1183 = vunpack.c.h.b16 %v1110
  %v1184 = vunpack.c.l.b16 %v1111
  %v1185 = vunpack.c.h.b16 %v1111
  %v1186 = vunpack.c.l.b16 %v1112
  %v1187 = vunpack.c.h.b16 %v1112
  %v1188 = vunpack.c.l.b16 %v1113
  %v1189 = vunpack.c.h.b16 %v1113
  %v1190 = vunpack.c.l.b16 %v1114
  %v1191 = vunpack.c.h.b16 %v1114
  %v1192 = vunpack.c.l.b16 %v1115
  %v1193 = vunpack.c.h.b16 %v1115
  %v1194 = vunpack.c.l.b16 %v1116
  %v1195 = vunpack.c.h.b16 %v1116
  %v1196 = vunpack.c.l.b16 %v1117
  %v1197 = vunpack.c.h.b16 %v1117
  %v1198 = vunpack.c.l.b16 %v1118
  %v1199 = vunpack.c.h.b16 %v1118
  %v1200 = vunpack.c.l.b16 %v1119
  %v1201 = vunpack.c.h.b16 %v1119
  %v1202 = vunpack.c.l.b16 %v1120
  %v1203 = vunpack.c.h.b16 %v1120
  %v1204 = vunpack.c.l.b16 %v1121
  %v1205 = vunpack.c.h.b16 %v1121
  %v1206 = vunpack.c.l.b16 %v1122
  %v1207 = vunpack.c.h.b16 %v1122
  %v1208 = vunpack.c.l.b16 %v1123
  %v1209 = vunpack.c.h.b16 %v1123
  %v1210 = vunpack.c.l.b16 %v1124
  %v1211 = vunpack.c.h.b16 %v1124
  %v1212 = vunpack.c.l.b16 %v1125
  %v1213 = vunpack.c.h.b16 %v1125
  %v1214 = vunpack.c.l.b16 %v1126
  %v1215 = vunpack.c.h.b16 %v1126
  %v1216 = vunpack.c.l.b16 %v1127
  %v1217 = vunpack.c.h.b16 %v1127
  %v1218 = vunpack.c.l.b16 %v1128
  %v1219 = vunpack.c.h.b16 %v1128
  %v1220 = vunpack.c.l.b16 %v1129
  %v1221 = vunpack.c.h.b16 %v1129
  %v1222 = vunpack.c.l.b16 %v1130
  %v1223 = vunpack.c.h.b16 %v1130
  %v1224 = vunpack.c.l.b16 %v1131
  %v1225 = vunpack.c.h.b16 %v1131
  %v1226 = vunpack.c.l.b16 %v1132
  %v1227 = vunpack.c.h.b16 %v1132
  %v1228 = vunpack.c.l.b16 %v1133
  %v1229 = vunpack.c.h.b16 %v1133
  %v1230 = vpack.c.b16 %v1166, %v1166
  %v1231 = vpack.c.b16 %v1167, %v1167
  %v1232 = vpack.c.b16 %v1168, %v1168
  %v1233 = vpack.c.b16 %v1169, %v1169
  %v1234 = vpack.c.b16 %v1170, %v1170
  %v1235 = vpack.c.b16 %v1171, %v1171
  %v1236 = vpack.c.b16 %v1172, %v1172
  %v1237 = vpack.c.b16 %v1173, %v1173
  %v1238 = vpack.c.b16 %v1174, %v1174
  %v1239 = vpack.c.b16 %v1175, %v1175
  %v1240 = vpack.c.b16 %v1176, %v1176
  %v1241 = vpack.c.b16 %v1177, %v1177
  %v1242 = vpack.c.b16 %v1178, %v1178
  %v1243 = vpack.c.b16 %v1179, %v1179
  %v1244 = vpack.c.b16 %v1180, %v1180
  %v1245 = vpack.c.b16 %v1181, %v1181
  %v1246 = vpack.c.b16 %v1182, %v1182
  %v1247 = vpack.c.b16 %v1183, %v1183
  %v1248 = vpack.c.b16 %v1184, %v1184
  %v1249 = vpack.c.b16 %v1185, %v1185
  %v1250 = vpack.c.b16 %v1186, %v1186
  %v1251 = vpack.c.b16 %v1187, %v1187
  %v1252 = vpack.c.b16 %v1188, %v1188
  %v1253 = vpack.c.b16 %v1189, %v1189
  %v1254 = vpack.c.b16 %v1190, %v1190
  %v1255 = vpack.c.b16 %v1191, %v1191
  %v1256 = vpack.c.b16 %v1192, %v1192
  %v1257 = vpack.c.b16 %v1193, %v1193
  %v1258 = vpack.c.b16 %v1194, %v1194
  %v1259 = vpack.c.b16 %v1195, %v1195
  %v1260 = vpack.c.b16 %v1196, %v1196
  %v1261 = vpack.c.b16 %v1197, %v1197
  %v1262 = vpack.c.b16 %v1198, %v1198
  %v1263 = vpack.c.b16 %v1199, %v1199
  %v1264 = vpack.c.b16 %v1200, %v1200
  %v1265 = vpack.c.b16 %v1201, %v1201
  %v1266 = vpack.c.b16 %v1202, %v1202
  %v1267 = vpack.c.b16 %v1203, %v1203
  %v1268 = vpack.c.b16 %v1204, %v1204
  %v1269 = vpack.c.b16 %v1205, %v1205
  %v1270 = vpack.c.b16 %v1206, %v1206
  %v1271 = vpack.c.b16 %v1207, %v1207
  %v1272 = vpack.c.b16 %v1208, %v1208
  %v1273 = vpack.c.b16 %v1209, %v1209
  %v1274 = vpack.c.b16 %v1210, %v1210
  %v1275 = vpack.c.b16 %v1211, %v1211
  %v1276 = vpack.c.b16 %v1212, %v1212
  %v1277 = vpack.c.b16 %v1213, %v1213
  %v1278 = vpack.c.b16 %v1214, %v1214
  %v1279 = vpack.c.b16 %v1215, %v1215
  %v1280 = vpack.c.b16 %v1216, %v1216
  %v1281 = vpack.c.b16 %v1217, %v1217
  %v1282 = vpack.c.b16 %v1218, %v1218
  %v1283 = vpack.c.b16 %v1219, %v1219
  %v1284 = vpack.c.b16 %v1220, %v1220
  %v1285 = vpack.c.b16 %v1221, %v1221
  %v1286 = vpack.c.b16 %v1222, %v1222
  %v1287 = vpack.c.b16 %v1223, %v1223
  %v1288 = vpack.c.b16 %v1224, %v1224
  %v1289 = vpack.c.b16 %v1225, %v1225
  %v1290 = vpack.c.b16 %v1226, %v1226
  %v1291 = vpack.c.b16 %v1227, %v1227
  %v1292 = vpack.c.b16 %v1228, %v1228
  %v1293 = vpack.c.b16 %v1229, %v1229
  %vm1358 = vcmask 257024
  %1359 = vst.msk [vmem:[%s3] sm:$0xf] %vm1358, %v1230
  %1360 = vst.msk [vmem:[%s3 + $0x4] sm:$0xf] %vm1358, %v1231
  %1361 = vst.msk [vmem:[%s3 + $0x8] sm:$0xf] %vm1358, %v1232
  %1362 = vst.msk [vmem:[%s3 + $0xc] sm:$0xf] %vm1358, %v1233
  %1363 = vst.msk [vmem:[%s3 + $0x10] sm:$0xf] %vm1358, %v1234
  %1364 = vst.msk [vmem:[%s3 + $0x14] sm:$0xf] %vm1358, %v1235
  %1365 = vst.msk [vmem:[%s3 + $0x18] sm:$0xf] %vm1358, %v1236
  %1366 = vst.msk [vmem:[%s3 + $0x1c] sm:$0xf] %vm1358, %v1237
  %1367 = vst.msk [vmem:[%s3 + $0x20] sm:$0xf] %vm1358, %v1238
  %1368 = vst.msk [vmem:[%s3 + $0x24] sm:$0xf] %vm1358, %v1239
  %1369 = vst.msk [vmem:[%s3 + $0x28] sm:$0xf] %vm1358, %v1240
  %1370 = vst.msk [vmem:[%s3 + $0x2c] sm:$0xf] %vm1358, %v1241
  %1371 = vst.msk [vmem:[%s3 + $0x30] sm:$0xf] %vm1358, %v1242
  %1372 = vst.msk [vmem:[%s3 + $0x34] sm:$0xf] %vm1358, %v1243
  %1373 = vst.msk [vmem:[%s3 + $0x38] sm:$0xf] %vm1358, %v1244
  %1374 = vst.msk [vmem:[%s3 + $0x3c] sm:$0xf] %vm1358, %v1245
  %1375 = vst.msk [vmem:[%s3 + $0x40] sm:$0xf] %vm1358, %v1246
  %1376 = vst.msk [vmem:[%s3 + $0x44] sm:$0xf] %vm1358, %v1247
  %1377 = vst.msk [vmem:[%s3 + $0x48] sm:$0xf] %vm1358, %v1248
  %1378 = vst.msk [vmem:[%s3 + $0x4c] sm:$0xf] %vm1358, %v1249
  %1379 = vst.msk [vmem:[%s3 + $0x50] sm:$0xf] %vm1358, %v1250
  %1380 = vst.msk [vmem:[%s3 + $0x54] sm:$0xf] %vm1358, %v1251
  %1381 = vst.msk [vmem:[%s3 + $0x58] sm:$0xf] %vm1358, %v1252
  %1382 = vst.msk [vmem:[%s3 + $0x5c] sm:$0xf] %vm1358, %v1253
  %1383 = vst.msk [vmem:[%s3 + $0x60] sm:$0xf] %vm1358, %v1254
  %1384 = vst.msk [vmem:[%s3 + $0x64] sm:$0xf] %vm1358, %v1255
  %1385 = vst.msk [vmem:[%s3 + $0x68] sm:$0xf] %vm1358, %v1256
  %1386 = vst.msk [vmem:[%s3 + $0x6c] sm:$0xf] %vm1358, %v1257
  %1387 = vst.msk [vmem:[%s3 + $0x70] sm:$0xf] %vm1358, %v1258
  %1388 = vst.msk [vmem:[%s3 + $0x74] sm:$0xf] %vm1358, %v1259
  %1389 = vst.msk [vmem:[%s3 + $0x78] sm:$0xf] %vm1358, %v1260
  %1390 = vst.msk [vmem:[%s3 + $0x7c] sm:$0xf] %vm1358, %v1261
  %1391 = vst.msk [vmem:[%s3 + $0x80] sm:$0xf] %vm1358, %v1262
  %1392 = vst.msk [vmem:[%s3 + $0x84] sm:$0xf] %vm1358, %v1263
  %1393 = vst.msk [vmem:[%s3 + $0x88] sm:$0xf] %vm1358, %v1264
  %1394 = vst.msk [vmem:[%s3 + $0x8c] sm:$0xf] %vm1358, %v1265
  %1395 = vst.msk [vmem:[%s3 + $0x90] sm:$0xf] %vm1358, %v1266
  %1396 = vst.msk [vmem:[%s3 + $0x94] sm:$0xf] %vm1358, %v1267
  %1397 = vst.msk [vmem:[%s3 + $0x98] sm:$0xf] %vm1358, %v1268
  %1398 = vst.msk [vmem:[%s3 + $0x9c] sm:$0xf] %vm1358, %v1269
  %1399 = vst.msk [vmem:[%s3 + $0xa0] sm:$0xf] %vm1358, %v1270
  %1400 = vst.msk [vmem:[%s3 + $0xa4] sm:$0xf] %vm1358, %v1271
  %1401 = vst.msk [vmem:[%s3 + $0xa8] sm:$0xf] %vm1358, %v1272
  %1402 = vst.msk [vmem:[%s3 + $0xac] sm:$0xf] %vm1358, %v1273
  %1403 = vst.msk [vmem:[%s3 + $0xb0] sm:$0xf] %vm1358, %v1274
  %1404 = vst.msk [vmem:[%s3 + $0xb4] sm:$0xf] %vm1358, %v1275
  %1405 = vst.msk [vmem:[%s3 + $0xb8] sm:$0xf] %vm1358, %v1276
  %1406 = vst.msk [vmem:[%s3 + $0xbc] sm:$0xf] %vm1358, %v1277
  %1407 = vst.msk [vmem:[%s3 + $0xc0] sm:$0xf] %vm1358, %v1278
  %1408 = vst.msk [vmem:[%s3 + $0xc4] sm:$0xf] %vm1358, %v1279
  %1409 = vst.msk [vmem:[%s3 + $0xc8] sm:$0xf] %vm1358, %v1280
  %1410 = vst.msk [vmem:[%s3 + $0xcc] sm:$0xf] %vm1358, %v1281
  %1411 = vst.msk [vmem:[%s3 + $0xd0] sm:$0xf] %vm1358, %v1282
  %1412 = vst.msk [vmem:[%s3 + $0xd4] sm:$0xf] %vm1358, %v1283
  %1413 = vst.msk [vmem:[%s3 + $0xd8] sm:$0xf] %vm1358, %v1284
  %1414 = vst.msk [vmem:[%s3 + $0xdc] sm:$0xf] %vm1358, %v1285
  %1415 = vst.msk [vmem:[%s3 + $0xe0] sm:$0xf] %vm1358, %v1286
  %1416 = vst.msk [vmem:[%s3 + $0xe4] sm:$0xf] %vm1358, %v1287
  %1417 = vst.msk [vmem:[%s3 + $0xe8] sm:$0xf] %vm1358, %v1288
  %1418 = vst.msk [vmem:[%s3 + $0xec] sm:$0xf] %vm1358, %v1289
  %1419 = vst.msk [vmem:[%s3 + $0xf0] sm:$0xf] %vm1358, %v1290
  %1420 = vst.msk [vmem:[%s3 + $0xf4] sm:$0xf] %vm1358, %v1291
  %1421 = vst.msk [vmem:[%s3 + $0xf8] sm:$0xf] %vm1358, %v1292
  %1422 = vst.msk [vmem:[%s3 + $0xfc] sm:$0xf] %vm1358, %v1293
  // Predicated region
  $region14: #{tpu_custom_call.1} parent=0 // pred_check
    _
  $region15: #{tpu_custom_call.1} parent=0 // pred_check_branch
    %1424 = sbr.rel (0) target = $region17
  $region16: #{tpu_custom_call.1} parent=0 // pred_region
    _
  $region17: #{tpu_custom_call.1} parent=0 // pred_fallthru
    _
  // Predicated region
  $region18: #{tpu_custom_call.1} parent=0 // pred_check
    _
  $region19: #{tpu_custom_call.1} parent=0 // pred_check_branch
    %1426 = sbr.rel (0) target = $region21
  $region20: #{tpu_custom_call.1} parent=0 // pred_region
    _
  $region21: #{tpu_custom_call.1} parent=0 // pred_fallthru
    _

</llo_original>
